<compile_context>
chip_gen: v7x
topology: tpu7x:2x2x1
jax: 0.10.0
libtpu: 0.0.40
codegen_flags: <defaults>
</compile_context>

<pallas_src>
import math
import functools

import jax
import jax.numpy as jnp
from jax.experimental import pallas as pl
from jax.experimental.pallas import tpu as pltpu


def _round_up(n, m):
    return ((n + m - 1) // m) * m


def _pick_tn(outp0):
    """Largest 128-multiple tile <= 512 that divides outp0 and (when possible)
    yields >= 2 output tiles so both v7x TensorCores get parallel work."""
    if outp0 < 256:
        return outp0
    start = (min(outp0 // 2, 512) // 128) * 128
    for cand in range(start, 127, -128):
        if outp0 % cand == 0:
            return cand
    return 128


# ---------------------------------------------------------------------------
# Kernel: one (tm, tn) output tile, reduction over In on grid axis 2.
# ---------------------------------------------------------------------------
def noisy_linear_kernel(x_ref, wmu_ref, wsig_ref, ein_ref, eout_ref,
                        bmu_ref, bsig_ref, o_ref, acc_ref, *, use_bf16):
    """
    x_ref    : (tm, tk)  activation tile
    wmu_ref  : (tk, tn)  weight_mu   in (In, Out) layout
    wsig_ref : (tk, tn)  weight_sigma in (In, Out) layout
    ein_ref  : (tk, 1)   eps_in slice
    eout_ref : (1, tn)   eps_out slice
    bmu_ref  : (1, tn)   bias_mu slice
    bsig_ref : (1, tn)   bias_sigma slice
    o_ref    : (tm, tn)  output tile (written on last k step only)
    acc_ref  : (tm, tn)  f32 VMEM accumulator
    """
    k = pl.program_id(2)

    @pl.when(k == 0)
    def _init():
        acc_ref[...] = jnp.zeros_like(acc_ref)

    # Factorized noise formed on the fly (VPU broadcast-mul); weight_epsilon is
    # never materialized in HBM:  w_eff[i,o] = wmu + wsig * eps_in[i]*eps_out[o]
    w_eff = wmu_ref[...] + wsig_ref[...] * (ein_ref[...] * eout_ref[...])
    x = x_ref[...]
    if use_bf16:                      # v6e/v7x bf16-native MXU path (opt-in)
        x = x.astype(jnp.bfloat16)
        w_eff = w_eff.astype(jnp.bfloat16)

    # Native (tm,tk)x(tk,tn) matmul on the MXU — no in-kernel transpose.
    acc_ref[...] += jnp.dot(x, w_eff, preferred_element_type=jnp.float32)

    @pl.when(k == pl.num_programs(2) - 1)
    def _finalize():
        b_eff = bmu_ref[...] + bsig_ref[...] * eout_ref[...]      # (1, tn)
        o_ref[...] = (acc_ref[...] + b_eff).astype(o_ref.dtype)


# ---------------------------------------------------------------------------
# One-time parameter preparation: transpose to (In, Out) and zero-pad to
# tile-aligned (Inp, Outp).  Done at init / reset_noise time, NOT per forward.
# ---------------------------------------------------------------------------
def prepare_noisy_linear_params(weight_mu, weight_sigma, eps_in, eps_out,
                                bias_mu, bias_sigma, *, tn=None, tk=None):
    out_f, in_f = weight_mu.shape
    inp0 = _round_up(in_f, 128)
    outp0 = _round_up(out_f, 128)

    tk = min(inp0, 1024) if tk is None else max(128, min(_round_up(tk, 128), inp0))
    tn = _pick_tn(outp0) if tn is None else max(128, min(_round_up(tn, 128), outp0))

    inp = _round_up(inp0, tk)
    outp = _round_up(outp0, tn)

    f32 = jnp.float32
    wmu_p = jnp.zeros((inp, outp), f32).at[:in_f, :out_f].set(jnp.asarray(weight_mu, f32).T)
    wsig_p = jnp.zeros((inp, outp), f32).at[:in_f, :out_f].set(jnp.asarray(weight_sigma, f32).T)
    ein_p = jnp.zeros((inp, 1), f32).at[:in_f, 0].set(jnp.asarray(eps_in, f32))
    eout_p = jnp.zeros((1, outp), f32).at[0, :out_f].set(jnp.asarray(eps_out, f32))
    bmu_p = jnp.zeros((1, outp), f32).at[0, :out_f].set(jnp.asarray(bias_mu, f32))
    bsig_p = jnp.zeros((1, outp), f32).at[0, :out_f].set(jnp.asarray(bias_sigma, f32))

    return dict(wmu=wmu_p, wsig=wsig_p, ein=ein_p, eout=eout_p,
                bmu=bmu_p, bsig=bsig_p,
                in_features=in_f, out_features=out_f, tn=tn, tk=tk)


# ---------------------------------------------------------------------------
# pallas_call wrapper (jitted on padded shapes; tile sizes are static args).
# ---------------------------------------------------------------------------
@functools.partial(jax.jit, static_argnames=("tm", "tn", "tk", "use_bf16"))
def _noisy_linear_padded(xp, wmu, wsig, ein, eout, bmu, bsig, *,
                         tm, tn, tk, use_bf16):
    bp, inp = xp.shape
    outp = wmu.shape[1]
    grid = (bp // tm, outp // tn, inp // tk)

    kernel = functools.partial(noisy_linear_kernel, use_bf16=use_bf16)

    return pl.pallas_call(
        kernel,
        out_shape=jax.ShapeDtypeStruct((bp, outp), jnp.float32),
        grid_spec=pltpu.PrefetchScalarGridSpec(
            num_scalar_prefetch=0,
            grid=grid,
            in_specs=[
                pl.BlockSpec((tm, tk), lambda i, j, k: (i, k)),   # x
                pl.BlockSpec((tk, tn), lambda i, j, k: (k, j)),   # weight_mu (In,Out)
                pl.BlockSpec((tk, tn), lambda i, j, k: (k, j)),   # weight_sigma (In,Out)
                pl.BlockSpec((tk, 1), lambda i, j, k: (k, 0)),    # eps_in
                pl.BlockSpec((1, tn), lambda i, j, k: (0, j)),    # eps_out
                pl.BlockSpec((1, tn), lambda i, j, k: (0, j)),    # bias_mu
                pl.BlockSpec((1, tn), lambda i, j, k: (0, j)),    # bias_sigma
            ],
            out_specs=pl.BlockSpec((tm, tn), lambda i, j, k: (i, j)),
            scratch_shapes=[pltpu.VMEM((tm, tn), jnp.float32)],
        ),
        compiler_params=pltpu.CompilerParams(
            dimension_semantics=("parallel", "parallel", "arbitrary"),
            # Peak double-buffered footprint at the largest tiles is ~12 MiB;
            # 48 MiB leaves headroom and is safe within v7x's 64 MiB per-TC VMEM.
            vmem_limit_bytes=48 * 1024 * 1024,
        ),
    )(xp, wmu, wsig, ein, eout, bmu, bsig)


def noisy_linear(x, params, *, tm=None, use_bf16=False):
    """NoisyLinear forward.  x: (B, In) f32, params: prepare_noisy_linear_params()."""
    b, in_f = x.shape
    assert in_f == params["in_features"]
    inp = params["wmu"].shape[0]
    out_f = params["out_features"]

    bp0 = _round_up(b, 8)
    if tm is None:
        # Cover the whole padded batch in one tile whenever possible so the two
        # weight streams are fetched from HBM exactly once.
        tm = min(bp0, 256)
    else:
        tm = max(8, min(_round_up(tm, 8), bp0))
    bp = _round_up(bp0, tm)

    if (b, in_f) == (bp, inp):
        xp = x.astype(jnp.float32)
    else:
        xp = jnp.zeros((bp, inp), jnp.float32).at[:b, :in_f].set(x)

    out_p = _noisy_linear_padded(
        xp, params["wmu"], params["wsig"], params["ein"], params["eout"],
        params["bmu"], params["bsig"],
        tm=tm, tn=params["tn"], tk=params["tk"], use_bf16=use_bf16)

    if (b, out_f) == out_p.shape:
        return out_p
    return out_p[:b, :out_f]


# ---------------------------------------------------------------------------
# Parameter / noise initialization (mirrors NoisyLinear.reset_parameters /
# reset_noise).  weight_epsilon is never materialized — only eps_in / eps_out.
# ---------------------------------------------------------------------------
def scale_noise(key, size):
    """Factorized gaussian noise: sign(x) * sqrt(|x|), x ~ N(0, 1)."""
    x = jax.random.normal(key, (size,), dtype=jnp.float32)
    return jnp.sign(x) * jnp.sqrt(jnp.abs(x))


def init_noisy_linear_params(key, in_features, out_features, std_init=0.6):
    k_wmu, k_bmu, k_ein, k_eout = jax.random.split(key, 4)
    mu_range = 1.0 / math.sqrt(in_features)

    weight_mu = jax.random.uniform(
        k_wmu, (out_features, in_features), jnp.float32, -mu_range, mu_range)
    weight_sigma = jnp.full((out_features, in_features),
                            std_init / math.sqrt(in_features), jnp.float32)
    bias_mu = jax.random.uniform(
        k_bmu, (out_features,), jnp.float32, -mu_range, mu_range)
    bias_sigma = jnp.full((out_features,),
                          std_init / math.sqrt(out_features), jnp.float32)

    eps_in = scale_noise(k_ein, in_features)     # epsilon_in
    eps_out = scale_noise(k_eout, out_features)  # epsilon_out (== bias_epsilon)

    return weight_mu, weight_sigma, eps_in, eps_out, bias_mu, bias_sigma


if __name__ == "__main__":
    def run_case(key, batch, in_features, out_features, tol):
        k_params, k_x = jax.random.split(key)
        (weight_mu, weight_sigma, eps_in, eps_out,
         bias_mu, bias_sigma) = init_noisy_linear_params(
            k_params, in_features, out_features)

        params = prepare_noisy_linear_params(
            weight_mu, weight_sigma, eps_in, eps_out, bias_mu, bias_sigma)

        x = jax.random.normal(k_x, (batch, in_features), dtype=jnp.float32)
        y = jax.block_until_ready(noisy_linear(x, params))

        # Pure-JAX reference (identical to the PyTorch forward with
        # weight_epsilon = outer(eps_out, eps_in), bias_epsilon = eps_out).
        w_eff = weight_mu + weight_sigma * jnp.outer(eps_out, eps_in)
        b_eff = bias_mu + bias_sigma * eps_out
        y_ref = jnp.dot(x, w_eff.T, precision=jax.lax.Precision.HIGHEST) + b_eff

        assert y.shape == (batch, out_features)
        err = float(jnp.max(jnp.abs(y - y_ref)))
        assert jnp.allclose(y, y_ref, atol=tol, rtol=tol), f"max abs err = {err}"

    key = jax.random.PRNGKey(0)
    k1, k2 = jax.random.split(key)

    # Small case matching the module's typical RL sizes.
    run_case(k1, batch=8, in_features=32, out_features=16, tol=1e-5)
    # Padded, multi-tile case (2 reduction steps, 3 output tiles, batch padding).
    run_case(k2, batch=12, in_features=1300, out_features=270, tol=1e-4)

    print("KERNEL_OK")
</pallas_src>

<mosaic_0001>
module attributes {stable_mosaic.version = 11 : i64} {
  func.func @noisy_linear_kernel(%arg0: i32, %arg1: i32, %arg2: i32, %arg3: memref<8x128xf32, #tpu.memory_space<vmem>>, %arg4: memref<128x128xf32, #tpu.memory_space<vmem>>, %arg5: memref<128x128xf32, #tpu.memory_space<vmem>>, %arg6: memref<128x1xf32, #tpu.memory_space<vmem>>, %arg7: memref<1x128xf32, #tpu.memory_space<vmem>>, %arg8: memref<1x128xf32, #tpu.memory_space<vmem>>, %arg9: memref<1x128xf32, #tpu.memory_space<vmem>>, %arg10: memref<8x128xf32, #tpu.memory_space<vmem>>, %arg11: memref<8x128xf32, #tpu.memory_space<vmem>>) attributes {dimension_semantics = [#tpu.dimension_semantics<parallel>, #tpu.dimension_semantics<parallel>, #tpu.dimension_semantics<arbitrary>], iteration_bounds = array<i64: 1, 1, 1>, scalar_prefetch = 0 : i64, scratch_operands = 1 : i64, tpu.core_type = #tpu.core_type<tc>, window_params = [{transform_indices = @transform_0, window_bounds = array<i64: 8, 128>}, {transform_indices = @transform_1, window_bounds = array<i64: 128, 128>}, {transform_indices = @transform_2, window_bounds = array<i64: 128, 128>}, {transform_indices = @transform_3, window_bounds = array<i64: 128, 1>}, {transform_indices = @transform_4, window_bounds = array<i64: 1, 128>}, {transform_indices = @transform_5, window_bounds = array<i64: 1, 128>}, {transform_indices = @transform_6, window_bounds = array<i64: 1, 128>}, {transform_indices = @transform_7, window_bounds = array<i64: 8, 128>}]} {
    %c0_i32 = arith.constant 0 : i32
    %0 = arith.cmpi eq, %arg2, %c0_i32 : i32
    %1 = arith.extui %0 : i1 to i32
    %c0_i32_0 = arith.constant 0 : i32
    %2 = arith.cmpi ne, %1, %c0_i32_0 : i32
    scf.if %2 {
      %cst_16 = arith.constant 0.000000e+00 : f32
      %20 = vector.broadcast %cst_16 : f32 to vector<8x128xf32>
      %c0_17 = arith.constant 0 : index
      %c0_18 = arith.constant 0 : index
      %21 = vector.load %arg11[%c0_17, %c0_18] : memref<8x128xf32, #tpu.memory_space<vmem>>, vector<8x128xf32>
      tpu.vector_store %arg11[%c0_17, %c0_18], %20 {strides = array<i32>} : memref<8x128xf32, #tpu.memory_space<vmem>>, vector<8x128xf32>,
    } else {
    }
    %c0 = arith.constant 0 : index
    %c0_1 = arith.constant 0 : index
    %3 = vector.load %arg4[%c0, %c0_1] : memref<128x128xf32, #tpu.memory_space<vmem>>, vector<128x128xf32>
    %c0_2 = arith.constant 0 : index
    %c0_3 = arith.constant 0 : index
    %4 = vector.load %arg5[%c0_2, %c0_3] : memref<128x128xf32, #tpu.memory_space<vmem>>, vector<128x128xf32>
    %c0_4 = arith.constant 0 : index
    %c0_5 = arith.constant 0 : index
    %5 = vector.load %arg6[%c0_4, %c0_5] : memref<128x1xf32, #tpu.memory_space<vmem>>, vector<128x1xf32>
    %c0_6 = arith.constant 0 : index
    %c0_7 = arith.constant 0 : index
    %6 = vector.load %arg7[%c0_6, %c0_7] : memref<1x128xf32, #tpu.memory_space<vmem>>, vector<1x128xf32>
    %7 = vector.broadcast %5 : vector<128x1xf32> to vector<128x128xf32>
    %8 = vector.broadcast %6 : vector<1x128xf32> to vector<128x128xf32>
    %9 = arith.mulf %7, %8 : vector<128x128xf32>
    %10 = arith.mulf %4, %9 : vector<128x128xf32>
    %11 = arith.addf %3, %10 : vector<128x128xf32>
    %c0_8 = arith.constant 0 : index
    %c0_9 = arith.constant 0 : index
    %12 = vector.load %arg3[%c0_8, %c0_9] : memref<8x128xf32, #tpu.memory_space<vmem>>, vector<8x128xf32>
    %c0_10 = arith.constant 0 : index
    %c0_11 = arith.constant 0 : index
    %13 = vector.load %arg11[%c0_10, %c0_11] : memref<8x128xf32, #tpu.memory_space<vmem>>, vector<8x128xf32>
    %cst = arith.constant dense<0.000000e+00> : vector<8x128xf32>
    %14 = tpu.matmul %12, %11, %cst {dimension_numbers = #tpu.dot_dimension_numbers<[1], [0], [0], [1], [0, 0, 1, 1], [], []>} : vector<8x128xf32>, vector<128x128xf32>, vector<8x128xf32> -> vector<8x128xf32>
    %15 = arith.addf %13, %14 : vector<8x128xf32>
    %c0_12 = arith.constant 0 : index
    %c0_13 = arith.constant 0 : index
    %16 = vector.load %arg11[%c0_12, %c0_13] : memref<8x128xf32, #tpu.memory_space<vmem>>, vector<8x128xf32>
    tpu.vector_store %arg11[%c0_12, %c0_13], %15 {strides = array<i32>} : memref<8x128xf32, #tpu.memory_space<vmem>>, vector<8x128xf32>,
    %c0_i32_14 = arith.constant 0 : i32
    %17 = arith.cmpi eq, %arg2, %c0_i32_14 : i32
    %18 = arith.extui %17 : i1 to i32
    %c0_i32_15 = arith.constant 0 : i32
    %19 = arith.cmpi ne, %18, %c0_i32_15 : i32
    scf.if %19 {
      %c0_16 = arith.constant 0 : index
      %c0_17 = arith.constant 0 : index
      %20 = vector.load %arg8[%c0_16, %c0_17] : memref<1x128xf32, #tpu.memory_space<vmem>>, vector<1x128xf32>
      %c0_18 = arith.constant 0 : index
      %c0_19 = arith.constant 0 : index
      %21 = vector.load %arg9[%c0_18, %c0_19] : memref<1x128xf32, #tpu.memory_space<vmem>>, vector<1x128xf32>
      %c0_20 = arith.constant 0 : index
      %c0_21 = arith.constant 0 : index
      %22 = vector.load %arg7[%c0_20, %c0_21] : memref<1x128xf32, #tpu.memory_space<vmem>>, vector<1x128xf32>
      %23 = arith.mulf %21, %22 : vector<1x128xf32>
      %24 = arith.addf %20, %23 : vector<1x128xf32>
      %c0_22 = arith.constant 0 : index
      %c0_23 = arith.constant 0 : index
      %25 = vector.load %arg11[%c0_22, %c0_23] : memref<8x128xf32, #tpu.memory_space<vmem>>, vector<8x128xf32>
      %26 = vector.broadcast %24 : vector<1x128xf32> to vector<8x128xf32>
      %27 = arith.addf %25, %26 : vector<8x128xf32>
      %c0_24 = arith.constant 0 : index
      %c0_25 = arith.constant 0 : index
      %28 = vector.load %arg10[%c0_24, %c0_25] : memref<8x128xf32, #tpu.memory_space<vmem>>, vector<8x128xf32>
      tpu.vector_store %arg10[%c0_24, %c0_25], %27 {strides = array<i32>} : memref<8x128xf32, #tpu.memory_space<vmem>>, vector<8x128xf32>,
    } else {
    }
    return
  }
  func.func @transform_0(%arg0: i32, %arg1: i32, %arg2: i32) -> (i32, i32) {
    %c0_i32 = arith.constant 0 : i32
    return %arg0, %arg2 : i32, i32
  }
  func.func @transform_1(%arg0: i32, %arg1: i32, %arg2: i32) -> (i32, i32) {
    %c0_i32 = arith.constant 0 : i32
    return %arg2, %arg1 : i32, i32
  }
  func.func @transform_2(%arg0: i32, %arg1: i32, %arg2: i32) -> (i32, i32) {
    %c0_i32 = arith.constant 0 : i32
    return %arg2, %arg1 : i32, i32
  }
  func.func @transform_3(%arg0: i32, %arg1: i32, %arg2: i32) -> (i32, i32) {
    %c0_i32 = arith.constant 0 : i32
    %c0_i32_0 = arith.constant 0 : i32
    return %arg2, %c0_i32 : i32, i32
  }
  func.func @transform_4(%arg0: i32, %arg1: i32, %arg2: i32) -> (i32, i32) {
    %c0_i32 = arith.constant 0 : i32
    %c0_i32_0 = arith.constant 0 : i32
    return %c0_i32, %arg1 : i32, i32
  }
  func.func @transform_5(%arg0: i32, %arg1: i32, %arg2: i32) -> (i32, i32) {
    %c0_i32 = arith.constant 0 : i32
    %c0_i32_0 = arith.constant 0 : i32
    return %c0_i32, %arg1 : i32, i32
  }
  func.func @transform_6(%arg0: i32, %arg1: i32, %arg2: i32) -> (i32, i32) {
    %c0_i32 = arith.constant 0 : i32
    %c0_i32_0 = arith.constant 0 : i32
    return %c0_i32, %arg1 : i32, i32
  }
  func.func @transform_7(%arg0: i32, %arg1: i32, %arg2: i32) -> (i32, i32) {
    %c0_i32 = arith.constant 0 : i32
    return %arg0, %arg1 : i32, i32
  }
}

</mosaic_0001>

<llo_original>
// kernel: _noisy_linear_padded.1
$region0: #{_noisy_linear_padded.1}
  #allocation0 [shape = 'u32[]', space=smem, size = 0x4, offset = 0x4, fixed_abs, tag = 'smem constant byte address 0x4 - core index']
  #allocation1 [shape = 'u32[144,128]{1,0:T(1,128)}', space=vmem, size = 0x12000, scoped, tag = 'internal scratch']
  #allocation2 [shape = 'f32[8,128]{1,0:T(8,128)}', space=vmem, size = 0x1000, scoped, tag = 'scratch operand']
  %s0 = inlined_call_operand.hbm [shape: f32[8,128], index: 0, kind: input, shape index: {}]
  %s1 = inlined_call_operand.vmem [shape: f32[128,128], index: 1, kind: input, shape index: {}]
  %s2 = inlined_call_operand.hbm [shape: f32[128,128], index: 2, kind: input, shape index: {}]
  %s3 = inlined_call_operand.vmem [shape: f32[128,1], index: 3, kind: input, shape index: {}]
  %s4 = inlined_call_operand.vmem [shape: f32[1,128], index: 4, kind: input, shape index: {}]
  %s5 = inlined_call_operand.vmem [shape: f32[1,128], index: 5, kind: input, shape index: {}]
  %s6 = inlined_call_operand.vmem [shape: f32[1,128], index: 6, kind: input, shape index: {}]
  %s7 = inlined_call_operand.hbm [shape: f32[8,128], index: 7, kind: output, shape index: {}]
  %s8 = sld [smem:[#allocation0]]
  $region54: #{_noisy_linear_padded.1} parent=0
    _
  %s10 = ssub.s32 1, %s8
  %s11 = scalar_select 0, %s10, %s8
  $region1: #{_noisy_linear_padded.1} parent=0
    #allocation3 [shape = 'u8[4096]{0}', space=vmem, size = 0x1000, scoped, tag = 'input window, operand 0, single buffered']
    #allocation4 [shape = 's32[1]{0}', space=sflag, size = 0x4, scoped, tag = 'scoped memory for _noisy_linear_padded.1']
    #allocation5 [shape = 's32[1]{0}', space=sflag, size = 0x4, scoped, tag = 'scoped memory for _noisy_linear_padded.1']
    #allocation6 [shape = 'u8[65536]{0}', space=vmem, size = 0x10000, scoped, tag = 'input window, operand 2, single buffered']
    #allocation7 [shape = 's32[1]{0}', space=sflag, size = 0x4, scoped, tag = 'scoped memory for _noisy_linear_padded.1']
    #allocation8 [shape = 'u8[4096]{0}', space=vmem, size = 0x1000, scoped, tag = 'output window, operand 0, single buffered']
    %12 = vsyncpa [#allocation4], 0
    %13 = vsyncpa [#allocation7], 0
    %14 = vsyncpa [#allocation5], 0
    // Predicated region
    $region2: #{_noisy_linear_padded.1} parent=1 // pred_check
      _
    $region3: #{_noisy_linear_padded.1} parent=1 // pred_check_branch
      %16 = sbr.rel (0) target = $region5
    $region4: #{_noisy_linear_padded.1} parent=1 // pred_region
      %s18 = ssub.s32 128, 128
      %19 = vsyncadd [#allocation4], %s18
      %s21 = sshll.u32 [#allocation3], 4
      %s22 = int_to_ptr.vmem [resolvable:$true] %s21
      %24 = dma.hbm_to_vmem [thread:$0]  %s0, 128, %s22, [#allocation4]
    $region5: #{_noisy_linear_padded.1} parent=1 // pred_fallthru
      _
    // Predicated region
    $region6: #{_noisy_linear_padded.1} parent=1 // pred_check
      _
    $region7: #{_noisy_linear_padded.1} parent=1 // pred_check_branch
      %26 = sbr.rel (0) target = $region9
    $region8: #{_noisy_linear_padded.1} parent=1 // pred_region
      _
    $region9: #{_noisy_linear_padded.1} parent=1 // pred_fallthru
      _
    // Predicated region
    $region10: #{_noisy_linear_padded.1} parent=1 // pred_check
      _
    $region11: #{_noisy_linear_padded.1} parent=1 // pred_check_branch
      %28 = sbr.rel (0) target = $region13
    $region12: #{_noisy_linear_padded.1} parent=1 // pred_region
      %s30 = ssub.s32 2048, 2048
      %31 = vsyncadd [#allocation7], %s30
      %s32 = sshll.u32 [#allocation6], 4
      %s33 = int_to_ptr.vmem [resolvable:$true] %s32
      %38 = dma.hbm_to_vmem [thread:$0]  %s2, 2048, %s33, [#allocation7], 128, 128, 8
    $region13: #{_noisy_linear_padded.1} parent=1 // pred_fallthru
      _
    // Predicated region
    $region14: #{_noisy_linear_padded.1} parent=1 // pred_check
      _
    $region15: #{_noisy_linear_padded.1} parent=1 // pred_check_branch
      %40 = sbr.rel (0) target = $region17
    $region16: #{_noisy_linear_padded.1} parent=1 // pred_region
      _
    $region17: #{_noisy_linear_padded.1} parent=1 // pred_fallthru
      _
    // Predicated region
    $region18: #{_noisy_linear_padded.1} parent=1 // pred_check
      _
    $region19: #{_noisy_linear_padded.1} parent=1 // pred_check_branch
      %42 = sbr.rel (0) target = $region21
    $region20: #{_noisy_linear_padded.1} parent=1 // pred_region
      _
    $region21: #{_noisy_linear_padded.1} parent=1 // pred_fallthru
      _
    // Predicated region
    $region22: #{_noisy_linear_padded.1} parent=1 // pred_check
      _
    $region23: #{_noisy_linear_padded.1} parent=1 // pred_check_branch
      %44 = sbr.rel (0) target = $region25
    $region24: #{_noisy_linear_padded.1} parent=1 // pred_region
      _
    $region25: #{_noisy_linear_padded.1} parent=1 // pred_fallthru
      _
    // Predicated region
    $region26: #{_noisy_linear_padded.1} parent=1 // pred_check
      _
    $region27: #{_noisy_linear_padded.1} parent=1 // pred_check_branch
      %46 = sbr.rel (0) target = $region29
    $region28: #{_noisy_linear_padded.1} parent=1 // pred_region
      _
    $region29: #{_noisy_linear_padded.1} parent=1 // pred_fallthru
      _
    // Predicated region
    $region30: #{_noisy_linear_padded.1} parent=1 // pred_check
      _
    $region31: #{_noisy_linear_padded.1} parent=1 // pred_check_branch
      %48 = sbr.rel (0) target = $region33
    $region32: #{_noisy_linear_padded.1} parent=1 // pred_region
      %49 = dma.done [#allocation4], 128
    $region33: #{_noisy_linear_padded.1} parent=1 // pred_fallthru
      _
    // Predicated region
    $region34: #{_noisy_linear_padded.1} parent=1 // pred_check
      _
    $region35: #{_noisy_linear_padded.1} parent=1 // pred_check_branch
      %51 = sbr.rel (0) target = $region37
    $region36: #{_noisy_linear_padded.1} parent=1 // pred_region
      %52 = dma.done [#allocation7], 2048
    $region37: #{_noisy_linear_padded.1} parent=1 // pred_fallthru
      _
    %p53 = scmp.eq.s32.totalorder 0, 0
    // Predicated region
    $region38: #{_noisy_linear_padded.1} parent=1 // pred_check
      %p54 = pneg %p53
    $region39: #{_noisy_linear_padded.1} parent=1 // pred_check_branch
      %56 = sbr.rel (%p54) target = $region41
    $region40: #{_noisy_linear_padded.1} parent=1 // pred_region
      %57 = vst [vmem:[#allocation2] sm:$0xff] 0.0
    $region41: #{_noisy_linear_padded.1} parent=1 // pred_fallthru
      _
    %v58 = vld [vmem:[%s1] sm:$0xff]
    %v59 = vld [vmem:[%s1 + $0x8] sm:$0xff]
    %v60 = vld [vmem:[%s1 + $0x10] sm:$0xff]
    %v61 = vld [vmem:[%s1 + $0x18] sm:$0xff]
    %v62 = vld [vmem:[%s1 + $0x20] sm:$0xff]
    %v63 = vld [vmem:[%s1 + $0x28] sm:$0xff]
    %v64 = vld [vmem:[%s1 + $0x30] sm:$0xff]
    %v65 = vld [vmem:[%s1 + $0x38] sm:$0xff]
    %v66 = vld [vmem:[%s1 + $0x40] sm:$0xff]
    %v67 = vld [vmem:[%s1 + $0x48] sm:$0xff]
    %v68 = vld [vmem:[%s1 + $0x50] sm:$0xff]
    %v69 = vld [vmem:[%s1 + $0x58] sm:$0xff]
    %v70 = vld [vmem:[%s1 + $0x60] sm:$0xff]
    %v71 = vld [vmem:[%s1 + $0x68] sm:$0xff]
    %v72 = vld [vmem:[%s1 + $0x70] sm:$0xff]
    %v73 = vld [vmem:[%s1 + $0x78] sm:$0xff]
    %v74 = vld [vmem:[#allocation6] sm:$0xff]
    %v75 = vld [vmem:[#allocation6 + $0x8] sm:$0xff]
    %v76 = vld [vmem:[#allocation6 + $0x10] sm:$0xff]
    %v77 = vld [vmem:[#allocation6 + $0x18] sm:$0xff]
    %v78 = vld [vmem:[#allocation6 + $0x20] sm:$0xff]
    %v79 = vld [vmem:[#allocation6 + $0x28] sm:$0xff]
    %v80 = vld [vmem:[#allocation6 + $0x30] sm:$0xff]
    %v81 = vld [vmem:[#allocation6 + $0x38] sm:$0xff]
    %v82 = vld [vmem:[#allocation6 + $0x40] sm:$0xff]
    %v83 = vld [vmem:[#allocation6 + $0x48] sm:$0xff]
    %v84 = vld [vmem:[#allocation6 + $0x50] sm:$0xff]
    %v85 = vld [vmem:[#allocation6 + $0x58] sm:$0xff]
    %v86 = vld [vmem:[#allocation6 + $0x60] sm:$0xff]
    %v87 = vld [vmem:[#allocation6 + $0x68] sm:$0xff]
    %v88 = vld [vmem:[#allocation6 + $0x70] sm:$0xff]
    %v89 = vld [vmem:[#allocation6 + $0x78] sm:$0xff]
    %v90 = vld [vmem:[%s3] sm:$0xff]
    %v91 = vld [vmem:[%s3 + $0x8] sm:$0xff]
    %v92 = vld [vmem:[%s3 + $0x10] sm:$0xff]
    %v93 = vld [vmem:[%s3 + $0x18] sm:$0xff]
    %v94 = vld [vmem:[%s3 + $0x20] sm:$0xff]
    %v95 = vld [vmem:[%s3 + $0x28] sm:$0xff]
    %v96 = vld [vmem:[%s3 + $0x30] sm:$0xff]
    %v97 = vld [vmem:[%s3 + $0x38] sm:$0xff]
    %v98 = vld [vmem:[%s3 + $0x40] sm:$0xff]
    %v99 = vld [vmem:[%s3 + $0x48] sm:$0xff]
    %v100 = vld [vmem:[%s3 + $0x50] sm:$0xff]
    %v101 = vld [vmem:[%s3 + $0x58] sm:$0xff]
    %v102 = vld [vmem:[%s3 + $0x60] sm:$0xff]
    %v103 = vld [vmem:[%s3 + $0x68] sm:$0xff]
    %v104 = vld [vmem:[%s3 + $0x70] sm:$0xff]
    %v105 = vld [vmem:[%s3 + $0x78] sm:$0xff]
    %v106 = vld [vmem:[%s4] sm:$0x1]
    %108 = vset.pattern.permute.xlu0 0
    %109 = vperm.xlu0 %108, %v90
    %v110 = vpop.permute.xlu0 %109
    %113 = vset.pattern.permute.xlu0 0
    %114 = vperm.xlu0 %113, %v91
    %v115 = vpop.permute.xlu0 %114
    %118 = vset.pattern.permute.xlu0 0
    %119 = vperm.xlu0 %118, %v92
    %v120 = vpop.permute.xlu0 %119
    %123 = vset.pattern.permute.xlu0 0
    %124 = vperm.xlu0 %123, %v93
    %v125 = vpop.permute.xlu0 %124
    %128 = vset.pattern.permute.xlu0 0
    %129 = vperm.xlu0 %128, %v94
    %v130 = vpop.permute.xlu0 %129
    %133 = vset.pattern.permute.xlu0 0
    %134 = vperm.xlu0 %133, %v95
    %v135 = vpop.permute.xlu0 %134
    %138 = vset.pattern.permute.xlu0 0
    %139 = vperm.xlu0 %138, %v96
    %v140 = vpop.permute.xlu0 %139
    %143 = vset.pattern.permute.xlu0 0
    %144 = vperm.xlu0 %143, %v97
    %v145 = vpop.permute.xlu0 %144
    %148 = vset.pattern.permute.xlu0 0
    %149 = vperm.xlu0 %148, %v98
    %v150 = vpop.permute.xlu0 %149
    %153 = vset.pattern.permute.xlu0 0
    %154 = vperm.xlu0 %153, %v99
    %v155 = vpop.permute.xlu0 %154
    %158 = vset.pattern.permute.xlu0 0
    %159 = vperm.xlu0 %158, %v100
    %v160 = vpop.permute.xlu0 %159
    %163 = vset.pattern.permute.xlu0 0
    %164 = vperm.xlu0 %163, %v101
    %v165 = vpop.permute.xlu0 %164
    %168 = vset.pattern.permute.xlu0 0
    %169 = vperm.xlu0 %168, %v102
    %v170 = vpop.permute.xlu0 %169
    %173 = vset.pattern.permute.xlu0 0
    %174 = vperm.xlu0 %173, %v103
    %v175 = vpop.permute.xlu0 %174
    %178 = vset.pattern.permute.xlu0 0
    %179 = vperm.xlu0 %178, %v104
    %v180 = vpop.permute.xlu0 %179
    %183 = vset.pattern.permute.xlu0 0
    %184 = vperm.xlu0 %183, %v105
    %v185 = vpop.permute.xlu0 %184
    %v188 = vlaneseq
    %v189 = vshrl.u32 %v188, 7
    %v190 = vsub.s32 0, %v189
    %v191 = vrot.slane %v106, %v190
    %v193 = vmul.f32 %v110, %v191
    %v194 = vmul.f32 %v115, %v191
    %v195 = vmul.f32 %v120, %v191
    %v196 = vmul.f32 %v125, %v191
    %v197 = vmul.f32 %v130, %v191
    %v198 = vmul.f32 %v135, %v191
    %v199 = vmul.f32 %v140, %v191
    %v200 = vmul.f32 %v145, %v191
    %v201 = vmul.f32 %v150, %v191
    %v202 = vmul.f32 %v155, %v191
    %v203 = vmul.f32 %v160, %v191
    %v204 = vmul.f32 %v165, %v191
    %v205 = vmul.f32 %v170, %v191
    %v206 = vmul.f32 %v175, %v191
    %v207 = vmul.f32 %v180, %v191
    %v208 = vmul.f32 %v185, %v191
    %v209 = vmul.f32 %v74, %v193
    %v210 = vmul.f32 %v75, %v194
    %v211 = vmul.f32 %v76, %v195
    %v212 = vmul.f32 %v77, %v196
    %v213 = vmul.f32 %v78, %v197
    %v214 = vmul.f32 %v79, %v198
    %v215 = vmul.f32 %v80, %v199
    %v216 = vmul.f32 %v81, %v200
    %v217 = vmul.f32 %v82, %v201
    %v218 = vmul.f32 %v83, %v202
    %v219 = vmul.f32 %v84, %v203
    %v220 = vmul.f32 %v85, %v204
    %v221 = vmul.f32 %v86, %v205
    %v222 = vmul.f32 %v87, %v206
    %v223 = vmul.f32 %v88, %v207
    %v224 = vmul.f32 %v89, %v208
    %v225 = vadd.f32 %v58, %v209
    %v226 = vadd.f32 %v59, %v210
    %v227 = vadd.f32 %v60, %v211
    %v228 = vadd.f32 %v61, %v212
    %v229 = vadd.f32 %v62, %v213
    %v230 = vadd.f32 %v63, %v214
    %v231 = vadd.f32 %v64, %v215
    %v232 = vadd.f32 %v65, %v216
    %v233 = vadd.f32 %v66, %v217
    %v234 = vadd.f32 %v67, %v218
    %v235 = vadd.f32 %v68, %v219
    %v236 = vadd.f32 %v69, %v220
    %v237 = vadd.f32 %v70, %v221
    %v238 = vadd.f32 %v71, %v222
    %v239 = vadd.f32 %v72, %v223
    %v240 = vadd.f32 %v73, %v224
    %v241 = vld [vmem:[#allocation3] sm:$0xff]
    %v242 = vld [vmem:[#allocation2] sm:$0xff]
    %243 = vmatprep.subr.mxu0 0.0
    %244 = vmatpush1.msra.mxu0 %v225
    %245 = vmatprep.subr.mxu0 0.0
    %246 = vmatpush1.msra.mxu0 %v226
    %247 = vmatprep.subr.mxu0 0.0
    %248 = vmatpush1.msra.mxu0 %v227
    %249 = vmatprep.subr.mxu0 0.0
    %250 = vmatpush1.msra.mxu0 %v228
    %251 = vmatprep.subr.mxu0 0.0
    %252 = vmatpush1.msra.mxu0 %v229
    %253 = vmatprep.subr.mxu0 0.0
    %254 = vmatpush1.msra.mxu0 %v230
    %255 = vmatprep.subr.mxu0 0.0
    %256 = vmatpush1.msra.mxu0 %v231
    %257 = vmatprep.subr.mxu0 0.0
    %258 = vmatpush1.msra.mxu0 %v232
    %259 = vmatprep.subr.mxu0 0.0
    %260 = vmatpush1.msra.mxu0 %v233
    %261 = vmatprep.subr.mxu0 0.0
    %262 = vmatpush1.msra.mxu0 %v234
    %263 = vmatprep.subr.mxu0 0.0
    %264 = vmatpush1.msra.mxu0 %v235
    %265 = vmatprep.subr.mxu0 0.0
    %266 = vmatpush1.msra.mxu0 %v236
    %267 = vmatprep.subr.mxu0 0.0
    %268 = vmatpush1.msra.mxu0 %v237
    %269 = vmatprep.subr.mxu0 0.0
    %270 = vmatpush1.msra.mxu0 %v238
    %271 = vmatprep.subr.mxu0 0.0
    %272 = vmatpush1.msra.mxu0 %v239
    %273 = vmatprep.subr.mxu0 0.0
    %274 = vmatpush1.msra.mxu0 %v240
    %275 = vmatprep.subr.mxu0 0.0
    %276 = vmatpush1.msra.mxu0 0.0
    %277 = vmatprep.subr.mxu0 0.0
    %278 = vmatpush1.msra.mxu0 0.0
    %279 = vmatprep.subr.mxu0 0.0
    %280 = vmatpush1.msra.mxu0 0.0
    %281 = vmatprep.subr.mxu0 0.0
    %282 = vmatpush1.msra.mxu0 0.0
    %283 = vmatprep.subr.mxu0 0.0
    %284 = vmatpush1.msra.mxu0 0.0
    %285 = vmatprep.subr.mxu0 0.0
    %286 = vmatpush1.msra.mxu0 0.0
    %287 = vmatprep.subr.mxu0 0.0
    %288 = vmatpush1.msra.mxu0 0.0
    %289 = vmatprep.subr.mxu0 0.0
    %290 = vmatpush1.msra.mxu0 0.0
    %291 = vmatprep.subr.mxu0 0.0
    %292 = vmatpush1.msra.mxu0 0.0
    %293 = vmatprep.subr.mxu0 0.0
    %294 = vmatpush1.msra.mxu0 0.0
    %295 = vmatprep.subr.mxu0 0.0
    %296 = vmatpush1.msra.mxu0 0.0
    %297 = vmatprep.subr.mxu0 0.0
    %298 = vmatpush1.msra.mxu0 0.0
    %299 = vmatprep.subr.mxu0 0.0
    %300 = vmatpush1.msra.mxu0 0.0
    %301 = vmatprep.subr.mxu0 0.0
    %302 = vmatpush1.msra.mxu0 0.0
    %303 = vmatprep.subr.mxu0 0.0
    %304 = vmatpush1.msra.mxu0 0.0
    %305 = vmatprep.subr.mxu0 0.0
    %306 = vmatpush1.msra.mxu0 0.0
    %307 = vmatprep.mubr.f32.mxu0 0.0
    %308 = vmatmul.mubr.f32.gmra.mrb[0].mxu0 %v241
    %v309 = vpop.f32.mrb[0].mxu0
    %v310 = vadd.f32 0.0, %v309
    %v311 = vpop.f32.mrb[0].mxu0
    %312 = vdwg.mxu0
    %v313 = vadd.f32 %v242, %v310
    %314 = vst [vmem:[#allocation2] sm:$0xff] %v313
    // Predicated region
    $region42: #{_noisy_linear_padded.1} parent=1 // pred_check
      %p315 = pneg %p53
    $region43: #{_noisy_linear_padded.1} parent=1 // pred_check_branch
      %317 = sbr.rel (%p315) target = $region45
    $region44: #{_noisy_linear_padded.1} parent=1 // pred_region
      %v318 = vld [vmem:[%s5] sm:$0x1]
      %v319 = vld [vmem:[%s6] sm:$0x1]
      %v320 = vld [vmem:[%s4] sm:$0x1]
      %v321 = vmul.f32 %v319, %v320
      %v322 = vadd.f32 %v318, %v321
      %v323 = vld [vmem:[#allocation2] sm:$0xff]
      %v325 = vlaneseq
      %v326 = vshrl.u32 %v325, 7
      %v327 = vsub.s32 0, %v326
      %v328 = vrot.slane %v322, %v327
      %v330 = vadd.f32 %v323, %v328
      %331 = vst [vmem:[#allocation8] sm:$0xff] %v330
    $region45: #{_noisy_linear_padded.1} parent=1 // pred_fallthru
      _
    // Predicated region
    $region46: #{_noisy_linear_padded.1} parent=1 // pred_check
      _
    $region47: #{_noisy_linear_padded.1} parent=1 // pred_check_branch
      %333 = sbr.rel (0) target = $region49
    $region48: #{_noisy_linear_padded.1} parent=1 // pred_region
      %s335 = ssub.s32 128, 128
      %336 = vsyncadd [#allocation5], %s335
      %s338 = sshll.u32 [#allocation8], 4
      %s339 = int_to_ptr.vmem [resolvable:$true] %s338
      %341 = dma.vmem_to_hbm [thread:$0]  %s339, 128, %s7, [#allocation5]
    $region49: #{_noisy_linear_padded.1} parent=1 // pred_fallthru
      _
    // Predicated region
    $region50: #{_noisy_linear_padded.1} parent=1 // pred_check
      _
    $region51: #{_noisy_linear_padded.1} parent=1 // pred_check_branch
      %343 = sbr.rel (0) target = $region53
    $region52: #{_noisy_linear_padded.1} parent=1 // pred_region
      %344 = dma.done [#allocation5], 128
    $region53: #{_noisy_linear_padded.1} parent=1 // pred_fallthru
      _
    %345 = vsyncpa [#allocation4], 1
    %346 = vsyncpa [#allocation7], 1
    %347 = vsyncpa [#allocation5], 1

</llo_original>
